<compile_context>
chip_gen: v7x
topology: tpu7x:2x2x1
jax: 0.10.0
libtpu: 0.0.40
codegen_flags: <defaults>
</compile_context>

<pallas_src>
import functools

import jax
import jax.numpy as jnp
from jax import lax
from jax.experimental import pallas as pl
from jax.experimental.pallas import tpu as pltpu


def _crop_kernel(ij_ref, img_hbm, out_ref, rows_vmem, copy_sem, *, C, W, TH, TW):
    """out[c] = img[c, i:i+TH, j:j+TW] (dtype-preserving, bit-exact)."""
    i = ij_ref[0]
    j = ij_ref[1]

    # --- Row crop at the DMA level -------------------------------------------
    # Only TH rows per channel ever leave HBM (dynamic element offset on a
    # non-minor dim is a plain strided DMA).
    cp = pltpu.make_async_copy(img_hbm.at[:, pl.ds(i, TH), :], rows_vmem, copy_sem)
    cp.start()
    cp.wait()

    # --- Column crop: dynamic lane rotate (XLU) + static slice ---------------
    # jnp.roll semantics: rolling right by (W - j) mod W brings column j to lane 0.
    shift = lax.rem(W - j, W)
    for c in range(C):  # short static unroll over channels (C is small)
        rolled = pltpu.roll(rows_vmem[c], shift, axis=1)
        out_ref[c] = rolled[:, :TW]


def random_crop_pallas(img, ij, crop_size):
    """img: (C, H, W); ij: int32 (2,) = [i, j]; returns (C, TH, TW)."""
    C, H, W = img.shape
    TH, TW = crop_size
    if TH > H or TW > W:
        raise ValueError(
            f"Required crop size {(TH, TW)} is larger than input image size {(H, W)}")

    kernel = functools.partial(_crop_kernel, C=C, W=W, TH=TH, TW=TW)

    return pl.pallas_call(
        kernel,
        out_shape=jax.ShapeDtypeStruct((C, TH, TW), img.dtype),
        grid_spec=pltpu.PrefetchScalarGridSpec(
            num_scalar_prefetch=1,          # ij -> SMEM; drives the DMA + rotate
            grid=(1,),                      # one step: crop is one DMA + one rotate/channel
            in_specs=[
                pl.BlockSpec(memory_space=pl.ANY),   # image stays in HBM; manual DMA
            ],
            out_specs=pl.BlockSpec((C, TH, TW), lambda n, ij_ref: (0, 0, 0)),
            scratch_shapes=[
                pltpu.VMEM((C, TH, W), img.dtype),   # row-cropped staging buffer
                pltpu.SemaphoreType.DMA,
            ],
        ),
        compiler_params=pltpu.CompilerParams(
            dimension_semantics=("arbitrary",),
        ),
    )(ij, img)


class RandomCropIndexPallas:
    """JAX/Pallas equivalent of RandomCropIndex (defaults: no padding)."""

    def __init__(self, size):
        if isinstance(size, int):
            size = (size, size)
        self.size = tuple(size)

    def __call__(self, sample, key):
        trans, img = sample["trans"], sample["image"]
        C, H, W = img.shape
        TH, TW = self.size
        k_i, k_j = jax.random.split(key)
        # get_params: torch.randint(0, h - th + 1) / torch.randint(0, w - tw + 1)
        i = jax.random.randint(k_i, (), 0, H - TH + 1, dtype=jnp.int32)
        j = jax.random.randint(k_j, (), 0, W - TW + 1, dtype=jnp.int32)
        ij = jnp.stack([i, j]).astype(jnp.int32)

        cropped = random_crop_pallas(img, ij, (TH, TW))
        new_trans = jnp.concatenate([trans, ij.astype(trans.dtype)], axis=0)
        return {"trans": new_trans, "image": cropped}


if __name__ == "__main__":
    key = jax.random.PRNGKey(0)
    k_img, k_trans, k_crop = jax.random.split(key, 3)

    # Small CHW image; W chosen as one full lane width so the dynamic lane
    # rotate sits in its canonical regime and stores are reasonably lane-dense.
    C, H, W = 3, 16, 128
    TH, TW = 8, 64
    crop = RandomCropIndexPallas(size=(TH, TW))

    img = jax.random.normal(k_img, (C, H, W), dtype=jnp.float32)
    trans = jax.random.randint(k_trans, (2,), 0, 10, dtype=jnp.int32)
    sample = {"trans": trans, "image": img}

    out = crop(sample, k_crop)
    out_img = jax.block_until_ready(out["image"])
    out_trans = jax.block_until_ready(out["trans"])

    # Reference check against a plain-JAX dynamic slice (must be bit-exact now).
    i = int(out_trans[2])
    j = int(out_trans[3])
    ref = lax.dynamic_slice(img, (0, i, j), (C, TH, TW))
    assert out_img.shape == (C, TH, TW)
    assert out_trans.shape == (4,)
    assert out_img.dtype == img.dtype
    assert jnp.array_equal(out_img, ref), "crop mismatch"

    print("KERNEL_OK")
</pallas_src>

<mosaic_0001>
module attributes {stable_mosaic.version = 11 : i64} {
  func.func @_crop_kernel(%arg0: i32, %arg1: memref<2xi32, #tpu.memory_space<smem>>, %arg2: memref<3x16x128xf32, #tpu.memory_space<any>>, %arg3: memref<3x8x64xf32, #tpu.memory_space<vmem>>, %arg4: memref<3x8x128xf32, #tpu.memory_space<vmem>>, %arg5: memref<!tpu.dma_semaphore, #tpu.memory_space<semaphore_mem>>) attributes {dimension_semantics = [#tpu.dimension_semantics<arbitrary>], iteration_bounds = array<i64: 1>, scalar_prefetch = 1 : i64, scratch_operands = 2 : i64, tpu.core_type = #tpu.core_type<tc>, window_params = [{}, {pipeline_mode = #tpu.pipeline_mode<synchronous>, transform_indices = @transform_1, window_bounds = array<i64: 3, 8, 64>}]} {
    %c0 = arith.constant 0 : index
    %0 = memref.load %arg1[%c0] : memref<2xi32, #tpu.memory_space<smem>>
    %c1 = arith.constant 1 : index
    %1 = memref.load %arg1[%c1] : memref<2xi32, #tpu.memory_space<smem>>
    %c0_i32 = arith.constant 0 : i32
    %c0_i32_0 = arith.constant 0 : i32
    %2 = tpu.memref_slice %arg2[%c0_i32, %0, %c0_i32_0] : memref<3x16x128xf32, #tpu.memory_space<any>> -> memref<3x8x128xf32, #tpu.memory_space<any>>
    tpu.enqueue_dma source(%2 : memref<3x8x128xf32, #tpu.memory_space<any>>) target(%arg4 : memref<3x8x128xf32, #tpu.memory_space<vmem>>) target_semaphore(%arg5 : memref<!tpu.dma_semaphore, #tpu.memory_space<semaphore_mem>>)
    %c0_i32_1 = arith.constant 0 : i32
    %c0_i32_2 = arith.constant 0 : i32
    %3 = tpu.memref_slice %arg2[%c0_i32_1, %0, %c0_i32_2] : memref<3x16x128xf32, #tpu.memory_space<any>> -> memref<3x8x128xf32, #tpu.memory_space<any>>
    tpu.wait_dma2 semaphore(%arg5 : memref<!tpu.dma_semaphore, #tpu.memory_space<semaphore_mem>>) src(%3 : memref<3x8x128xf32, #tpu.memory_space<any>>) dst(%arg4 : memref<3x8x128xf32, #tpu.memory_space<vmem>>)
    %c128_i32 = arith.constant 128 : i32
    %4 = arith.subi %c128_i32, %1 : i32
    %c128_i32_3 = arith.constant 128 : i32
    %5 = arith.remsi %4, %c128_i32_3 : i32
    %c0_4 = arith.constant 0 : index
    %c0_5 = arith.constant 0 : index
    %c0_6 = arith.constant 0 : index
    %6 = vector.load %arg4[%c0_4, %c0_5, %c0_6] : memref<3x8x128xf32, #tpu.memory_space<vmem>>, vector<1x8x128xf32>
    %7 = vector.shape_cast %6 : vector<1x8x128xf32> to vector<8x128xf32>
    %8 = tpu.dynamic_rotate %7 by %5 dim 1 : vector<8x128xf32>, i32 -> vector<8x128xf32>
    %9 = vector.extract_strided_slice %8 {offsets = [0, 0], sizes = [8, 64], strides = [1, 1]} : vector<8x128xf32> to vector<8x64xf32>
    %c0_7 = arith.constant 0 : index
    %c0_8 = arith.constant 0 : index
    %c0_9 = arith.constant 0 : index
    %10 = vector.load %arg3[%c0_7, %c0_8, %c0_9] : memref<3x8x64xf32, #tpu.memory_space<vmem>>, vector<1x8x64xf32>
    %11 = vector.shape_cast %10 : vector<1x8x64xf32> to vector<8x64xf32>
    %12 = vector.shape_cast %9 : vector<8x64xf32> to vector<1x8x64xf32>
    tpu.vector_store %arg3[%c0_7, %c0_8, %c0_9], %12 {strides = array<i32>} : memref<3x8x64xf32, #tpu.memory_space<vmem>>, vector<1x8x64xf32>,
    %c1_10 = arith.constant 1 : index
    %c0_11 = arith.constant 0 : index
    %c0_12 = arith.constant 0 : index
    %13 = vector.load %arg4[%c1_10, %c0_11, %c0_12] : memref<3x8x128xf32, #tpu.memory_space<vmem>>, vector<1x8x128xf32>
    %14 = vector.shape_cast %13 : vector<1x8x128xf32> to vector<8x128xf32>
    %15 = tpu.dynamic_rotate %14 by %5 dim 1 : vector<8x128xf32>, i32 -> vector<8x128xf32>
    %16 = vector.extract_strided_slice %15 {offsets = [0, 0], sizes = [8, 64], strides = [1, 1]} : vector<8x128xf32> to vector<8x64xf32>
    %c1_13 = arith.constant 1 : index
    %c0_14 = arith.constant 0 : index
    %c0_15 = arith.constant 0 : index
    %17 = vector.load %arg3[%c1_13, %c0_14, %c0_15] : memref<3x8x64xf32, #tpu.memory_space<vmem>>, vector<1x8x64xf32>
    %18 = vector.shape_cast %17 : vector<1x8x64xf32> to vector<8x64xf32>
    %19 = vector.shape_cast %16 : vector<8x64xf32> to vector<1x8x64xf32>
    tpu.vector_store %arg3[%c1_13, %c0_14, %c0_15], %19 {strides = array<i32>} : memref<3x8x64xf32, #tpu.memory_space<vmem>>, vector<1x8x64xf32>,
    %c2 = arith.constant 2 : index
    %c0_16 = arith.constant 0 : index
    %c0_17 = arith.constant 0 : index
    %20 = vector.load %arg4[%c2, %c0_16, %c0_17] : memref<3x8x128xf32, #tpu.memory_space<vmem>>, vector<1x8x128xf32>
    %21 = vector.shape_cast %20 : vector<1x8x128xf32> to vector<8x128xf32>
    %22 = tpu.dynamic_rotate %21 by %5 dim 1 : vector<8x128xf32>, i32 -> vector<8x128xf32>
    %23 = vector.extract_strided_slice %22 {offsets = [0, 0], sizes = [8, 64], strides = [1, 1]} : vector<8x128xf32> to vector<8x64xf32>
    %c2_18 = arith.constant 2 : index
    %c0_19 = arith.constant 0 : index
    %c0_20 = arith.constant 0 : index
    %24 = vector.load %arg3[%c2_18, %c0_19, %c0_20] : memref<3x8x64xf32, #tpu.memory_space<vmem>>, vector<1x8x64xf32>
    %25 = vector.shape_cast %24 : vector<1x8x64xf32> to vector<8x64xf32>
    %26 = vector.shape_cast %23 : vector<8x64xf32> to vector<1x8x64xf32>
    tpu.vector_store %arg3[%c2_18, %c0_19, %c0_20], %26 {strides = array<i32>} : memref<3x8x64xf32, #tpu.memory_space<vmem>>, vector<1x8x64xf32>,
    return
  }
  func.func @transform_1(%arg0: i32, %arg1: memref<2xi32, #tpu.memory_space<smem>>) -> (i32, i32, i32) {
    %c0_i32 = arith.constant 0 : i32
    %c0_i32_0 = arith.constant 0 : i32
    %c0_i32_1 = arith.constant 0 : i32
    %c0_i32_2 = arith.constant 0 : i32
    return %c0_i32, %c0_i32_0, %c0_i32_1 : i32, i32, i32
  }
}

</mosaic_0001>

<llo_original>
// kernel: tpu_custom_call.1
$region0: #{tpu_custom_call.1}
  #allocation0 [shape = 'u32[]', space=smem, size = 0x4, offset = 0x4, fixed_abs, tag = 'smem constant byte address 0x4 - core index']
  #allocation1 [shape = 'u32[144,128]{1,0:T(1,128)}', space=vmem, size = 0x12000, scoped, tag = 'internal scratch']
  #allocation2 [shape = 'f32[3,8,128]{2,1,0:T(8,128)}', space=vmem, size = 0x3000, scoped, tag = 'scratch operand']
  #allocation3 [shape = 's32[1]{0}', space=sflag, size = 0x4, scoped, tag = 'scratch operand']
  #allocation4 [shape = 's32[1]{0}', space=sflag, size = 0x4, scoped, tag = 'scoped memory for tpu_custom_call.1']
  #allocation5 [shape = 'u8[512]{0}', space=smem, size = 0x200, scoped, tag = 'prefetched SMEM operand 0']
  #allocation8 [shape = 's32[]', space=sflag, size = 0x4, offset = 0, fixed_abs, tag = 'sflag constant byte address 0x0 - dummy sync flag']
  %s0 = inlined_call_operand.hbm [shape: s32[2], index: 0, kind: input, shape index: {}]
  %s1 = inlined_call_operand.hbm [shape: f32[3,16,128], index: 1, kind: input, shape index: {}]
  %s2 = inlined_call_operand.hbm [shape: f32[3,8,64], index: 2, kind: output, shape index: {}]
  %s3 = sld [smem:[#allocation0]]
  $region10: #{tpu_custom_call.1} parent=0
    _
  %s5 = ssub.s32 1, %s3
  %s6 = scalar_select 0, %s5, %s3
  %8 = dma.hbm_to_smem %s0, 16, [#allocation5], [#allocation4]
  %9 = dma.done [#allocation4], 16
  %10 = sfence
  $region1: #{tpu_custom_call.1} parent=0
    #allocation6 [shape = 'u8[12288]{0}', space=vmem, size = 0x3000, scoped, tag = 'output window, operand 0, single buffered']
    #allocation7 [shape = 's32[1]{0}', space=sflag, size = 0x4, scoped, tag = 'scoped memory for tpu_custom_call.1']
    %11 = vsyncpa [#allocation7], 0
    %s12 = sld [smem:[#allocation5]]
    %s13 = sld [smem:[#allocation5 + $0x1]]
    %s14 = smul.addr %s12, 16
    %s15 = scalar_lea.hbm %s1, %s14
    %s17 = sshll.u32 [#allocation2], 4
    %s18 = int_to_ptr.vmem [resolvable:$true] %s17
    %20 = dma.hbm_to_vmem [thread:$0]  %s15, 384, %s18, [#allocation3], 256, 128, 8
    %s21 = smul.u32 3, 8
    %s22 = smul.u32 %s21, 1
    %s23 = sshll.u32 %s22, 4
    %24 = dma.done [#allocation3], %s23
    %s25 = ssub.s32 128, %s13
    %p26 = scmp.lt.s32.totalorder %s25, 0
    %s27 = ssub.s32 0, %s25
    %s28 = scalar_select %p26, %s27, %s25
    %s29 = sand.u32 %s28, 127
    %s30 = ssub.s32 0, %s29
    %s31 = scalar_select %p26, %s30, %s29
    %v32 = vld [vmem:[#allocation2] sm:$0xff]
    %s33 = sand.u32 %s31, 127
    %s34 = sand.u32 %s33, 127
    %35 = vrot.lane.b32.xlu0 %v32, %s34
    %v36 = vpop.permute.xlu0 %35
    %vm37 = vcmask 523264
    %38 = vst.msk [vmem:[#allocation6] sm:$0xff] %vm37, %v36
    %s39 = scalar_lea.vmem [#allocation2], 8
    %v40 = vld [vmem:[%s39] sm:$0xff]
    %41 = vrot.lane.b32.xlu0 %v40, %s34
    %v42 = vpop.permute.xlu0 %41
    %s43 = scalar_lea.vmem [#allocation6], 8
    %44 = vst.msk [vmem:[%s43] sm:$0xff] %vm37, %v42
    %s45 = scalar_lea.vmem [#allocation2], 16
    %v46 = vld [vmem:[%s45] sm:$0xff]
    %47 = vrot.lane.b32.xlu0 %v46, %s34
    %v48 = vpop.permute.xlu0 %47
    %s49 = scalar_lea.vmem [#allocation6], 16
    %50 = vst.msk [vmem:[%s49] sm:$0xff] %vm37, %v48
    // Predicated region
    $region2: #{tpu_custom_call.1} parent=1 // pred_check
      _
    $region3: #{tpu_custom_call.1} parent=1 // pred_check_branch
      %52 = sbr.rel (0) target = $region5
    $region4: #{tpu_custom_call.1} parent=1 // pred_region
      %s54 = ssub.s32 384, 384
      %55 = vsyncadd [#allocation7], %s54
      %s56 = sshll.u32 [#allocation6], 4
      %s57 = int_to_ptr.vmem [resolvable:$true] %s56
      %62 = dma.vmem_to_hbm [thread:$0]  %s57, 384, %s2, [#allocation7], 128, 128, 8
    $region5: #{tpu_custom_call.1} parent=1 // pred_fallthru
      _
    // Predicated region
    $region6: #{tpu_custom_call.1} parent=1 // pred_check
      _
    $region7: #{tpu_custom_call.1} parent=1 // pred_check_branch
      %64 = sbr.rel (0) target = $region9
    $region8: #{tpu_custom_call.1} parent=1 // pred_region
      %65 = dma.done [#allocation7], 384
    $region9: #{tpu_custom_call.1} parent=1 // pred_fallthru
      _
    %66 = vsyncpa [#allocation7], 1
  %67 = vsyncmov [#allocation3]
  %s68 = vpop.sfrf %67
  %p69 = scmp.eq.s32.totalorder %s68, 0
  %p70 = pneg %p69
  %72 = shalt.err (%p70)

</llo_original>
